<compile_context>
chip_gen: v6e
topology: v6e:2x2x1
jax: 0.10.0
libtpu: 0.0.40
codegen_flags: <defaults>
</compile_context>

<pallas_src>
from functools import partial

import jax
import jax.numpy as jnp
from jax.experimental import pallas as pl
from jax.experimental.pallas import tpu as pltpu


def _make_fused_block_kernel(NT, H, WC):
    """conv1+bn1+relu -> conv2+bn2 + identity shortcut + relu, lane-packed.

    Block layout: activations are (NT, H, W*C) and flattened to (NT*H, W*C)
    rows; w*_ref are the stacked block-banded (3*W*C, W*C) bf16 matrices
    (BN scale folded in); b*_ref are packed (1, W*C) f32 biases.
    """
    M = NT * H

    def kernel(x_ref, w1_ref, b1_ref, w2_ref, b2_ref, out_ref):
        x = x_ref[...].reshape(M, WC).astype(jnp.float32)

        # Per-image vertical-halo masks on the flattened row axis:
        # rows that are the first / last row of an image get a zero halo.
        row = jax.lax.broadcasted_iota(jnp.int32, (M, WC), 0)
        is_top = (row % H) == 0
        is_bot = (row % H) == (H - 1)

        def conv(v, w_ref):
            # 3 vertical taps via XLU sublane rolls + border masking; the
            # horizontal taps / W-border zero pad / BN scale live inside the
            # banded weights.  One K=3*WC matmul per conv.
            up = jnp.where(is_top, 0.0, pltpu.roll(v, 1, 0))       # row h-1
            dn = jnp.where(is_bot, 0.0, pltpu.roll(v, M - 1, 0))   # row h+1
            lhs = jnp.concatenate([up, v, dn], axis=-1)            # (M, 3*WC)
            return jnp.dot(lhs.astype(jnp.bfloat16), w_ref[...],
                           preferred_element_type=jnp.float32)

        out1 = jnp.maximum(conv(x, w1_ref) + b1_ref[...], 0.0)     # bn1 + relu
        out2 = conv(out1, w2_ref) + b2_ref[...] + x                # bn2 + id
        out_ref[...] = (jnp.maximum(out2, 0.0)
                        .astype(out_ref.dtype)
                        .reshape(NT, H, WC))

    return kernel


def _fold_bn(gamma, beta, mean, var, eps=1e-5):
    scale = gamma / jnp.sqrt(var + eps)
    bias = beta - mean * scale
    return scale, bias


def _band_pack_weights(w_hwio, scale, W):
    """Fold BN scale into the conv weights and expand the horizontal taps into
    a block-banded (3*W*Cin, W*Cout) bf16 matrix acting on lane-packed rows.

    banded[kh, wi*Cin+ci, wo*Cout+co] = scale[co] * w[kh, kw, ci, co]
        where kw = wi - wo + 1 if |wi - wo| <= 1 else the entry is 0
    (absent band entries reproduce the zero padding at the W borders).  The
    three vertical taps are stacked along the contraction axis (K = 3*W*Cin).
    """
    Cin, Cout = w_hwio.shape[2], w_hwio.shape[3]
    ws = (w_hwio * scale).astype(jnp.float32)                  # scale over Cout
    # E[kw, wi, wo] = 1  iff  wi == wo + (kw - 1)
    E = jnp.stack([jnp.eye(W, k=1, dtype=jnp.float32),
                   jnp.eye(W, k=0, dtype=jnp.float32),
                   jnp.eye(W, k=-1, dtype=jnp.float32)])       # (3, wi, wo)
    banded = jnp.einsum('dio,hdcz->hicoz', E, ws)              # (3,W,Cin,W,Cout)
    banded = banded.reshape(3 * W * Cin, W * Cout)
    return banded.astype(jnp.bfloat16)


def _pack_bias(bias, W):
    # per-channel bias tiled over W so it is a plain 128-lane f32 add in-kernel
    return jnp.tile(bias, W).reshape(1, -1).astype(jnp.float32)


@partial(jax.jit, static_argnames=("n_tile",))
def basic_block_forward(x_nchw, params, *, n_tile=4):
    N, C, H, W = x_nchw.shape
    Cout = params["w1"].shape[-1]
    # TODO(synk): projection shortcut for stride != 1 / in_planes != planes.
    assert C == Cout and params["w2"].shape[2] == Cout
    assert N % n_tile == 0

    scale1, bias1 = _fold_bn(params["g1"], params["b1"], params["m1"], params["v1"])
    scale2, bias2 = _fold_bn(params["g2"], params["b2"], params["m2"], params["v2"])

    w1p = _band_pack_weights(params["w1"], scale1, W)   # (3*W*C, W*C) bf16
    w2p = _band_pack_weights(params["w2"], scale2, W)
    b1p = _pack_bias(bias1, W)                          # (1, W*C) f32
    b2p = _pack_bias(bias2, W)

    # NCHW (PyTorch) -> NHWC -> lane-packed (N, H, W*C); W*C = 128 here so
    # loads/stores are full 128-lane and unmasked.
    WC = W * C
    xp = jnp.transpose(x_nchw, (0, 2, 3, 1)).reshape(N, H, WC)

    out_p = pl.pallas_call(
        _make_fused_block_kernel(n_tile, H, WC),
        out_shape=jax.ShapeDtypeStruct((N, H, WC), x_nchw.dtype),
        grid=(N // n_tile,),
        in_specs=[
            pl.BlockSpec((n_tile, H, WC), lambda n: (n, 0, 0)),   # x (images)
            # constant index maps: weight/bias blocks are not re-fetched
            pl.BlockSpec((3 * WC, WC), lambda n: (0, 0)),         # banded w1
            pl.BlockSpec((1, WC), lambda n: (0, 0)),              # packed bias1
            pl.BlockSpec((3 * WC, WC), lambda n: (0, 0)),         # banded w2
            pl.BlockSpec((1, WC), lambda n: (0, 0)),              # packed bias2
        ],
        out_specs=pl.BlockSpec((n_tile, H, WC), lambda n: (n, 0, 0)),
        compiler_params=pltpu.CompilerParams(
            dimension_semantics=("parallel",)),
    )(xp, w1p, b1p, w2p, b2p)

    # unpack back to NCHW
    return jnp.transpose(out_p.reshape(N, H, W, C), (0, 3, 1, 2))


def _reference_forward(x_nchw, params):
    """Pure-JAX f32 reference (lax conv) for verification."""
    x = jnp.transpose(x_nchw, (0, 2, 3, 1))
    dn = ("NHWC", "HWIO", "NHWC")
    s1, b1 = _fold_bn(params["g1"], params["b1"], params["m1"], params["v1"])
    s2, b2 = _fold_bn(params["g2"], params["b2"], params["m2"], params["v2"])

    def conv(v, w):
        return jax.lax.conv_general_dilated(
            v, w, window_strides=(1, 1), padding=((1, 1), (1, 1)),
            dimension_numbers=dn)

    out = jnp.maximum(conv(x, params["w1"]) * s1 + b1, 0.0)
    out = conv(out, params["w2"]) * s2 + b2 + x
    out = jnp.maximum(out, 0.0)
    return jnp.transpose(out, (0, 3, 1, 2))


def init_params(key, in_planes, planes):
    ks = jax.random.split(key, 10)
    std1 = (2.0 / (9 * in_planes)) ** 0.5
    std2 = (2.0 / (9 * planes)) ** 0.5
    w1 = jax.random.normal(ks[0], (3, 3, in_planes, planes), jnp.float32) * std1
    w2 = jax.random.normal(ks[1], (3, 3, planes, planes), jnp.float32) * std2
    # BatchNorm affine + running stats (deterministic, nontrivial)
    g1 = 1.0 + 0.1 * jax.random.normal(ks[2], (planes,), jnp.float32)
    b1 = 0.1 * jax.random.normal(ks[3], (planes,), jnp.float32)
    m1 = 0.1 * jax.random.normal(ks[4], (planes,), jnp.float32)
    v1 = jnp.abs(jax.random.normal(ks[5], (planes,), jnp.float32)) + 0.5
    g2 = 1.0 + 0.1 * jax.random.normal(ks[6], (planes,), jnp.float32)
    b2 = 0.1 * jax.random.normal(ks[7], (planes,), jnp.float32)
    m2 = 0.1 * jax.random.normal(ks[8], (planes,), jnp.float32)
    v2 = jnp.abs(jax.random.normal(ks[9], (planes,), jnp.float32)) + 0.5
    return {"w1": w1, "g1": g1, "b1": b1, "m1": m1, "v1": v1,
            "w2": w2, "g2": g2, "b2": b2, "m2": m2, "v2": v2}


if __name__ == "__main__":
    key = jax.random.PRNGKey(0)
    k_x, k_p = jax.random.split(key)

    # in_planes = planes = 8, stride = 1; W*C = 128 -> lane-dense packing.
    # N=8 with n_tile=4 -> 2 grid steps (both v7x TCs busy), M=64 per matmul.
    N, C, H, W = 8, 8, 16, 16
    x = jax.random.normal(k_x, (N, C, H, W), jnp.float32)
    params = init_params(k_p, C, C)

    out = jax.block_until_ready(basic_block_forward(x, params, n_tile=4))
    ref = jax.block_until_ready(_reference_forward(x, params))

    assert out.shape == (N, C, H, W)
    max_err = float(jnp.max(jnp.abs(out - ref)))
    # bf16 MXU operands (f32 accumulation) -> loosened tolerance vs f32 ref.
    assert jnp.allclose(out, ref, atol=1e-1, rtol=5e-2), max_err

    print("KERNEL_OK")
</pallas_src>

<mosaic_0001>
module attributes {stable_mosaic.version = 11 : i64} {
  func.func @kernel(%arg0: i32, %arg1: memref<4x16x128xf32, #tpu.memory_space<vmem>>, %arg2: memref<384x128xbf16, #tpu.memory_space<vmem>>, %arg3: memref<1x128xf32, #tpu.memory_space<vmem>>, %arg4: memref<384x128xbf16, #tpu.memory_space<vmem>>, %arg5: memref<1x128xf32, #tpu.memory_space<vmem>>, %arg6: memref<4x16x128xf32, #tpu.memory_space<vmem>>) attributes {dimension_semantics = [#tpu.dimension_semantics<parallel>], iteration_bounds = array<i64: 2>, scalar_prefetch = 0 : i64, scratch_operands = 0 : i64, tpu.core_type = #tpu.core_type<tc>, window_params = [{transform_indices = @transform_0, window_bounds = array<i64: 4, 16, 128>}, {pipeline_mode = #tpu.pipeline_mode<synchronous>, transform_indices = @transform_1, window_bounds = array<i64: 384, 128>}, {pipeline_mode = #tpu.pipeline_mode<synchronous>, transform_indices = @transform_2, window_bounds = array<i64: 1, 128>}, {pipeline_mode = #tpu.pipeline_mode<synchronous>, transform_indices = @transform_3, window_bounds = array<i64: 384, 128>}, {pipeline_mode = #tpu.pipeline_mode<synchronous>, transform_indices = @transform_4, window_bounds = array<i64: 1, 128>}, {transform_indices = @transform_5, window_bounds = array<i64: 4, 16, 128>}]} {
    %c0 = arith.constant 0 : index
    %c0_0 = arith.constant 0 : index
    %c0_1 = arith.constant 0 : index
    %0 = vector.load %arg1[%c0, %c0_0, %c0_1] : memref<4x16x128xf32, #tpu.memory_space<vmem>>, vector<4x16x128xf32>
    %1 = vector.shape_cast %0 : vector<4x16x128xf32> to vector<64x128xf32>
    %2 = tpu.iota {dimensions = array<i32: 0>} : vector<64x128xi32>
    %c16_i32 = arith.constant 16 : i32
    %c0_i32 = arith.constant 0 : i32
    %3 = arith.cmpi eq, %c16_i32, %c0_i32 : i32
    %c1_i32 = arith.constant 1 : i32
    %4 = arith.select %3, %c1_i32, %c16_i32 : i32
    %5 = vector.broadcast %4 : i32 to vector<64x128xi32>
    %6 = arith.remsi %2, %5 : vector<64x128xi32>
    %c0_i32_2 = arith.constant 0 : i32
    %7 = vector.broadcast %c0_i32_2 : i32 to vector<64x128xi32>
    %8 = arith.cmpi ne, %6, %7 : vector<64x128xi32>
    %c0_i32_3 = arith.constant 0 : i32
    %9 = vector.broadcast %c0_i32_3 : i32 to vector<64x128xi32>
    %10 = arith.cmpi slt, %6, %9 : vector<64x128xi32>
    %c0_i32_4 = arith.constant 0 : i32
    %11 = arith.cmpi slt, %4, %c0_i32_4 : i32
    %12 = vector.broadcast %11 : i1 to vector<64x128xi1>
    %13 = vector.broadcast %12 : vector<64x128xi1> to vector<64x128xi1>
    %14 = arith.xori %10, %13 : vector<64x128xi1>
    %15 = arith.andi %14, %8 : vector<64x128xi1>
    %16 = vector.broadcast %4 : i32 to vector<64x128xi32>
    %17 = arith.addi %6, %16 : vector<64x128xi32>
    %18 = arith.select %15, %17, %6 : vector<64x128xi1>, vector<64x128xi32>
    %c0_i32_5 = arith.constant 0 : i32
    %19 = vector.broadcast %c0_i32_5 : i32 to vector<64x128xi32>
    %20 = arith.cmpi eq, %18, %19 : vector<64x128xi32>
    %c16_i32_6 = arith.constant 16 : i32
    %c0_i32_7 = arith.constant 0 : i32
    %21 = arith.cmpi eq, %c16_i32_6, %c0_i32_7 : i32
    %c1_i32_8 = arith.constant 1 : i32
    %22 = arith.select %21, %c1_i32_8, %c16_i32_6 : i32
    %23 = vector.broadcast %22 : i32 to vector<64x128xi32>
    %24 = arith.remsi %2, %23 : vector<64x128xi32>
    %c0_i32_9 = arith.constant 0 : i32
    %25 = vector.broadcast %c0_i32_9 : i32 to vector<64x128xi32>
    %26 = arith.cmpi ne, %24, %25 : vector<64x128xi32>
    %c0_i32_10 = arith.constant 0 : i32
    %27 = vector.broadcast %c0_i32_10 : i32 to vector<64x128xi32>
    %28 = arith.cmpi slt, %24, %27 : vector<64x128xi32>
    %c0_i32_11 = arith.constant 0 : i32
    %29 = arith.cmpi slt, %22, %c0_i32_11 : i32
    %30 = vector.broadcast %29 : i1 to vector<64x128xi1>
    %31 = vector.broadcast %30 : vector<64x128xi1> to vector<64x128xi1>
    %32 = arith.xori %28, %31 : vector<64x128xi1>
    %33 = arith.andi %32, %26 : vector<64x128xi1>
    %34 = vector.broadcast %22 : i32 to vector<64x128xi32>
    %35 = arith.addi %24, %34 : vector<64x128xi32>
    %36 = arith.select %33, %35, %24 : vector<64x128xi1>, vector<64x128xi32>
    %c15_i32 = arith.constant 15 : i32
    %37 = vector.broadcast %c15_i32 : i32 to vector<64x128xi32>
    %38 = arith.cmpi eq, %36, %37 : vector<64x128xi32>
    %c1_i32_12 = arith.constant 1 : i32
    %39 = tpu.dynamic_rotate %1 by %c1_i32_12 dim 0 : vector<64x128xf32>, i32 -> vector<64x128xf32>
    %cst = arith.constant 0.000000e+00 : f32
    %40 = vector.broadcast %cst : f32 to vector<64x128xf32>
    %41 = arith.select %20, %40, %39 : vector<64x128xi1>, vector<64x128xf32>
    %c63_i32 = arith.constant 63 : i32
    %42 = tpu.dynamic_rotate %1 by %c63_i32 dim 0 : vector<64x128xf32>, i32 -> vector<64x128xf32>
    %cst_13 = arith.constant 0.000000e+00 : f32
    %43 = vector.broadcast %cst_13 : f32 to vector<64x128xf32>
    %44 = arith.select %38, %43, %42 : vector<64x128xi1>, vector<64x128xf32>
    %45 = tpu.concatenate %41, %1, %44 in 1 : vector<64x128xf32>, vector<64x128xf32>, vector<64x128xf32> -> vector<64x384xf32>
    %46 = arith.truncf %45 : vector<64x384xf32> to vector<64x384xbf16>
    %c0_14 = arith.constant 0 : index
    %c0_15 = arith.constant 0 : index
    %47 = vector.load %arg2[%c0_14, %c0_15] : memref<384x128xbf16, #tpu.memory_space<vmem>>, vector<384x128xbf16>
    %cst_16 = arith.constant dense<0.000000e+00> : vector<64x128xf32>
    %48 = tpu.matmul %46, %47, %cst_16 {dimension_numbers = #tpu.dot_dimension_numbers<[1], [0], [0], [1], [0, 0, 1, 1], [], []>} : vector<64x384xbf16>, vector<384x128xbf16>, vector<64x128xf32> -> vector<64x128xf32>
    %c0_17 = arith.constant 0 : index
    %c0_18 = arith.constant 0 : index
    %49 = vector.load %arg3[%c0_17, %c0_18] : memref<1x128xf32, #tpu.memory_space<vmem>>, vector<1x128xf32>
    %50 = vector.broadcast %49 : vector<1x128xf32> to vector<64x128xf32>
    %51 = arith.addf %48, %50 : vector<64x128xf32>
    %cst_19 = arith.constant 0.000000e+00 : f32
    %52 = vector.broadcast %cst_19 : f32 to vector<64x128xf32>
    %53 = arith.maximumf %51, %52 : vector<64x128xf32>
    %c1_i32_20 = arith.constant 1 : i32
    %54 = tpu.dynamic_rotate %53 by %c1_i32_20 dim 0 : vector<64x128xf32>, i32 -> vector<64x128xf32>
    %cst_21 = arith.constant 0.000000e+00 : f32
    %55 = vector.broadcast %cst_21 : f32 to vector<64x128xf32>
    %56 = arith.select %20, %55, %54 : vector<64x128xi1>, vector<64x128xf32>
    %c63_i32_22 = arith.constant 63 : i32
    %57 = tpu.dynamic_rotate %53 by %c63_i32_22 dim 0 : vector<64x128xf32>, i32 -> vector<64x128xf32>
    %cst_23 = arith.constant 0.000000e+00 : f32
    %58 = vector.broadcast %cst_23 : f32 to vector<64x128xf32>
    %59 = arith.select %38, %58, %57 : vector<64x128xi1>, vector<64x128xf32>
    %60 = tpu.concatenate %56, %53, %59 in 1 : vector<64x128xf32>, vector<64x128xf32>, vector<64x128xf32> -> vector<64x384xf32>
    %61 = arith.truncf %60 : vector<64x384xf32> to vector<64x384xbf16>
    %c0_24 = arith.constant 0 : index
    %c0_25 = arith.constant 0 : index
    %62 = vector.load %arg4[%c0_24, %c0_25] : memref<384x128xbf16, #tpu.memory_space<vmem>>, vector<384x128xbf16>
    %cst_26 = arith.constant dense<0.000000e+00> : vector<64x128xf32>
    %63 = tpu.matmul %61, %62, %cst_26 {dimension_numbers = #tpu.dot_dimension_numbers<[1], [0], [0], [1], [0, 0, 1, 1], [], []>} : vector<64x384xbf16>, vector<384x128xbf16>, vector<64x128xf32> -> vector<64x128xf32>
    %c0_27 = arith.constant 0 : index
    %c0_28 = arith.constant 0 : index
    %64 = vector.load %arg5[%c0_27, %c0_28] : memref<1x128xf32, #tpu.memory_space<vmem>>, vector<1x128xf32>
    %65 = vector.broadcast %64 : vector<1x128xf32> to vector<64x128xf32>
    %66 = arith.addf %63, %65 : vector<64x128xf32>
    %67 = arith.addf %66, %1 : vector<64x128xf32>
    %cst_29 = arith.constant 0.000000e+00 : f32
    %68 = vector.broadcast %cst_29 : f32 to vector<64x128xf32>
    %69 = arith.maximumf %67, %68 : vector<64x128xf32>
    %70 = vector.shape_cast %69 : vector<64x128xf32> to vector<4x16x128xf32>
    %c0_30 = arith.constant 0 : index
    %c0_31 = arith.constant 0 : index
    %c0_32 = arith.constant 0 : index
    %71 = vector.load %arg6[%c0_30, %c0_31, %c0_32] : memref<4x16x128xf32, #tpu.memory_space<vmem>>, vector<4x16x128xf32>
    tpu.vector_store %arg6[%c0_30, %c0_31, %c0_32], %70 {strides = array<i32>} : memref<4x16x128xf32, #tpu.memory_space<vmem>>, vector<4x16x128xf32>,
    return
  }
  func.func @transform_0(%arg0: i32) -> (i32, i32, i32) {
    %c0_i32 = arith.constant 0 : i32
    %c0_i32_0 = arith.constant 0 : i32
    %c0_i32_1 = arith.constant 0 : i32
    return %arg0, %c0_i32, %c0_i32_0 : i32, i32, i32
  }
  func.func @transform_1(%arg0: i32) -> (i32, i32) {
    %c0_i32 = arith.constant 0 : i32
    %c0_i32_0 = arith.constant 0 : i32
    %c0_i32_1 = arith.constant 0 : i32
    return %c0_i32, %c0_i32_0 : i32, i32
  }
  func.func @transform_2(%arg0: i32) -> (i32, i32) {
    %c0_i32 = arith.constant 0 : i32
    %c0_i32_0 = arith.constant 0 : i32
    %c0_i32_1 = arith.constant 0 : i32
    return %c0_i32, %c0_i32_0 : i32, i32
  }
  func.func @transform_3(%arg0: i32) -> (i32, i32) {
    %c0_i32 = arith.constant 0 : i32
    %c0_i32_0 = arith.constant 0 : i32
    %c0_i32_1 = arith.constant 0 : i32
    return %c0_i32, %c0_i32_0 : i32, i32
  }
  func.func @transform_4(%arg0: i32) -> (i32, i32) {
    %c0_i32 = arith.constant 0 : i32
    %c0_i32_0 = arith.constant 0 : i32
    %c0_i32_1 = arith.constant 0 : i32
    return %c0_i32, %c0_i32_0 : i32, i32
  }
  func.func @transform_5(%arg0: i32) -> (i32, i32, i32) {
    %c0_i32 = arith.constant 0 : i32
    %c0_i32_0 = arith.constant 0 : i32
    %c0_i32_1 = arith.constant 0 : i32
    return %arg0, %c0_i32, %c0_i32_0 : i32, i32, i32
  }
}

</mosaic_0001>

<llo_original>
// kernel: tile.13
$region0: #{tile.13}
  #allocation0 [shape = 's32[1]{0}', space=sflag, size = 0x4, scoped, tag = 'scoped memory for tile.13']
  %s0 = inlined_call_operand.vmem [shape: f32[8], index: 0, kind: input, shape index: {}]
  %s1 = inlined_call_operand.vmem [shape: f32[16,8], index: 1, kind: output, shape index: {}]
  // Predicated region
  $region2: #{tile.13} parent=0 // pred_check
    _
  $region3: #{tile.13} parent=0 // pred_check_branch
    %3 = sbr.rel (0) target = $region5
  $region4: #{tile.13} parent=0 // pred_region
    _
  $region5: #{tile.13} parent=0 // pred_fallthru
    _
  %v4 = vld [vmem:[%s0] ss:$0 sm:$0xff]
  %5 = vst [vmem:[%s1] sm:$0xff] %v4
  %s6 = scalar_lea.vmem %s1, 8
  %7 = vst [vmem:[%s6] sm:$0xff] %v4

// kernel: tile.14
$region0: #{tile.14}
  %s0 = inlined_call_operand.vmem [shape: f32[16,8], index: 0, kind: input, shape index: {}]
  %s1 = inlined_call_operand.vmem [shape: f32[1,128], index: 1, kind: output, shape index: {}]
  $region1: #{tile.14} parent=0
    #allocation0 [shape = 'u8[4096]{0}', space=vmem, size = 0x1000, scoped, tag = 'scoped mem for output reshape']
    %v2 = vld [vmem:[%s0] sm:$0x1]
    %vm3 = vcmask 64512
    %4 = vst.msk [vmem:[#allocation0] sm:$0x1] %vm3, %v2
    %s5 = scalar_lea.vmem %s0, 15
    %v6 = vld [vmem:[%s5] sm:$0x1]
    %7 = vrot.lane.b32.xlu0 %v6, 120
    %v8 = vpop.permute.xlu0 %7
    %vm9 = vcmask 1048512
    %10 = vst.msk [vmem:[#allocation0] sm:$0x1] %vm9, %v8
    %s11 = scalar_lea.vmem %s0, 14
    %v12 = vld [vmem:[%s11] sm:$0x1]
    %13 = vrot.lane.b32.xlu0 %v12, 112
    %v14 = vpop.permute.xlu0 %13
    %vm15 = vcmask 982912
    %16 = vst.msk [vmem:[#allocation0] sm:$0x1] %vm15, %v14
    %s17 = scalar_lea.vmem %s0, 13
    %v18 = vld [vmem:[%s17] sm:$0x1]
    %19 = vrot.lane.b32.xlu0 %v18, 104
    %v20 = vpop.permute.xlu0 %19
    %vm21 = vcmask 917312
    %22 = vst.msk [vmem:[#allocation0] sm:$0x1] %vm21, %v20
    %s23 = scalar_lea.vmem %s0, 12
    %v24 = vld [vmem:[%s23] sm:$0x1]
    %25 = vrot.lane.b32.xlu0 %v24, 96
    %v26 = vpop.permute.xlu0 %25
    %vm27 = vcmask 851712
    %28 = vst.msk [vmem:[#allocation0] sm:$0x1] %vm27, %v26
    %s29 = scalar_lea.vmem %s0, 11
    %v30 = vld [vmem:[%s29] sm:$0x1]
    %31 = vrot.lane.b32.xlu0 %v30, 88
    %v32 = vpop.permute.xlu0 %31
    %vm33 = vcmask 786112
    %34 = vst.msk [vmem:[#allocation0] sm:$0x1] %vm33, %v32
    %s35 = scalar_lea.vmem %s0, 10
    %v36 = vld [vmem:[%s35] sm:$0x1]
    %37 = vrot.lane.b32.xlu0 %v36, 80
    %v38 = vpop.permute.xlu0 %37
    %vm39 = vcmask 720512
    %40 = vst.msk [vmem:[#allocation0] sm:$0x1] %vm39, %v38
    %s41 = scalar_lea.vmem %s0, 9
    %v42 = vld [vmem:[%s41] sm:$0x1]
    %43 = vrot.lane.b32.xlu0 %v42, 72
    %v44 = vpop.permute.xlu0 %43
    %vm45 = vcmask 654912
    %46 = vst.msk [vmem:[#allocation0] sm:$0x1] %vm45, %v44
    %s47 = scalar_lea.vmem %s0, 8
    %v48 = vld [vmem:[%s47] sm:$0x1]
    %49 = vrot.lane.b32.xlu0 %v48, 64
    %v50 = vpop.permute.xlu0 %49
    %vm51 = vcmask 589312
    %52 = vst.msk [vmem:[#allocation0] sm:$0x1] %vm51, %v50
    %s53 = scalar_lea.vmem %s0, 7
    %v54 = vld [vmem:[%s53] sm:$0x1]
    %55 = vrot.lane.b32.xlu0 %v54, 56
    %v56 = vpop.permute.xlu0 %55
    %vm57 = vcmask 523712
    %58 = vst.msk [vmem:[#allocation0] sm:$0x1] %vm57, %v56
    %s59 = scalar_lea.vmem %s0, 6
    %v60 = vld [vmem:[%s59] sm:$0x1]
    %61 = vrot.lane.b32.xlu0 %v60, 48
    %v62 = vpop.permute.xlu0 %61
    %vm63 = vcmask 458112
    %64 = vst.msk [vmem:[#allocation0] sm:$0x1] %vm63, %v62
    %s65 = scalar_lea.vmem %s0, 5
    %v66 = vld [vmem:[%s65] sm:$0x1]
    %67 = vrot.lane.b32.xlu0 %v66, 40
    %v68 = vpop.permute.xlu0 %67
    %vm69 = vcmask 392512
    %70 = vst.msk [vmem:[#allocation0] sm:$0x1] %vm69, %v68
    %s71 = scalar_lea.vmem %s0, 4
    %v72 = vld [vmem:[%s71] sm:$0x1]
    %73 = vrot.lane.b32.xlu0 %v72, 32
    %v74 = vpop.permute.xlu0 %73
    %vm75 = vcmask 326912
    %76 = vst.msk [vmem:[#allocation0] sm:$0x1] %vm75, %v74
    %s77 = scalar_lea.vmem %s0, 3
    %v78 = vld [vmem:[%s77] sm:$0x1]
    %79 = vrot.lane.b32.xlu0 %v78, 24
    %v80 = vpop.permute.xlu0 %79
    %vm81 = vcmask 261312
    %82 = vst.msk [vmem:[#allocation0] sm:$0x1] %vm81, %v80
    %s83 = scalar_lea.vmem %s0, 2
    %v84 = vld [vmem:[%s83] sm:$0x1]
    %85 = vrot.lane.b32.xlu0 %v84, 16
    %v86 = vpop.permute.xlu0 %85
    %vm87 = vcmask 195712
    %88 = vst.msk [vmem:[#allocation0] sm:$0x1] %vm87, %v86
    %s89 = scalar_lea.vmem %s0, 1
    %v90 = vld [vmem:[%s89] sm:$0x1]
    %91 = vrot.lane.b32.xlu0 %v90, 8
    %v92 = vpop.permute.xlu0 %91
    %vm93 = vcmask 130112
    %94 = vst.msk [vmem:[#allocation0] sm:$0x1] %vm93, %v92
    %s96 = sshll.u32 1, 1
    %s97 = ssub.s32 %s96, 1
    %v99 = vld [vmem:[#allocation0] sm:%s97]
    %s100 = sshll.u32 1, 1
    %s101 = ssub.s32 %s100, 1
    %102 = vst [vmem:[%s1] sm:%s101] %v99

// kernel: basic_block_forward.1
$region0: #{basic_block_forward.1}
  #allocation0 [shape = 'u32[]', space=smem, size = 0x4, offset = 0x4, fixed_abs, tag = 'smem constant byte address 0x4 - core index']
  #allocation1 [shape = 'u32[144,128]{1,0:T(1,128)}', space=vmem, size = 0x12000, scoped, tag = 'internal scratch']
  %s0 = inlined_call_operand.vmem [shape: f32[8,16,128], index: 0, kind: input, shape index: {}]
  %s1 = inlined_call_operand.vmem [shape: bf16[384,128], index: 1, kind: input, shape index: {}]
  %s2 = inlined_call_operand.vmem [shape: f32[1,128], index: 2, kind: input, shape index: {}]
  %s3 = inlined_call_operand.vmem [shape: bf16[384,128], index: 3, kind: input, shape index: {}]
  %s4 = inlined_call_operand.vmem [shape: f32[1,128], index: 4, kind: input, shape index: {}]
  %s5 = inlined_call_operand.vmem [shape: f32[8,16,128], index: 5, kind: output, shape index: {}]
  %s6 = sld [smem:[#allocation0]]
  $region53: #{basic_block_forward.1} parent=0
    _
  %s8 = ssub.s32 1, %s6
  %s9 = scalar_select 0, %s8, %s6
  loop: start=0, step=1, limit=4
  $region2: #{basic_block_forward.1} parent=0 // loop_pre_header
    _
  $region3: #{basic_block_forward.1} parent=0 // loop_header
    %s11 = sphi 0, %s15
    %p12 = scmp.ge.s32.totalorder %s11, 4
    %s21 = sphi 0, %s23
    %s24 = sphi 0, %s21
    %s25 = sphi 0, %s24
    %s41 = sphi 0, %s25
    %s45 = sphi 0, %s45
    %s47 = sphi 0, %s45
    %s48 = sphi 0, %s47
    %s62 = sphi 0, %s48
    %s66 = sphi 0, %s66
    %s68 = sphi 0, %s66
    %s69 = sphi 0, %s68
    %s83 = sphi 0, %s69
    %s87 = sphi 0, %s87
    %s89 = sphi 0, %s87
    %s90 = sphi 0, %s89
    %s104 = sphi 0, %s90
    %s108 = sphi 0, %s108
    %s110 = sphi 0, %s108
    %s111 = sphi 0, %s110
    %s125 = sphi 0, %s111
    %s131 = sphi 0, %s133
    %s134 = sphi 0, %s131
    %s135 = sphi 0, %s134
    %s151 = sphi 0, %s135
  $region4: #{basic_block_forward.1} parent=0 // loop_header_branch
    %14 = sbr.rel (%p12) target = $region8
  $region5: #{basic_block_forward.1} parent=0 // loop_body
    %s16 = ssub.s32 %s11, 1
    %s17 = ssub.s32 %s11, 2
    %s18 = sadd.s32 %s11, 1
    %s19 = ssub.s32 %s11, %s18
    %p20 = scmp.eq.s32.totalorder %s19, 0
    %s22 = sadd.s32 %s21, 1
    %s23 = scalar_select %p20, %s21, %s22
    %p26 = pneg %p20
    %p27 = scmp.eq.s32.totalorder %s11, 1
    %p28 = por %p26, %p27
    %p29 = scmp.ne.s32.totalorder %s21, %s24
    %p30 = scmp.eq.s32.totalorder %s11, 0
    %p31 = por %p29, %p30
    %p32 = scmp.ne.s32.totalorder %s21, %s24
    %p33 = scmp.eq.s32.totalorder %s16, 1
    %p34 = por %p32, %p33
    %p35 = scmp.ne.s32.totalorder %s24, %s25
    %p36 = scmp.eq.s32.totalorder %s16, 0
    %p37 = por %p35, %p36
    %p38 = scmp.ne.s32.totalorder %s24, %s25
    %p39 = scmp.eq.s32.totalorder %s17, 1
    %p40 = por %p38, %p39
    %p42 = scmp.ne.s32.totalorder %s25, %s41
    %p43 = scmp.eq.s32.totalorder %s17, 0
    %p44 = por %p42, %p43
    %s46 = sadd.s32 %s45, 1
    %p49 = scmp.eq.s32.totalorder %s11, 1
    %p50 = scmp.ne.s32.totalorder %s45, %s47
    %p51 = scmp.eq.s32.totalorder %s11, 0
    %p52 = por %p50, %p51
    %p53 = scmp.ne.s32.totalorder %s45, %s47
    %p54 = scmp.eq.s32.totalorder %s16, 1
    %p55 = por %p53, %p54
    %p56 = scmp.ne.s32.totalorder %s47, %s48
    %p57 = scmp.eq.s32.totalorder %s16, 0
    %p58 = por %p56, %p57
    %p59 = scmp.ne.s32.totalorder %s47, %s48
    %p60 = scmp.eq.s32.totalorder %s17, 1
    %p61 = por %p59, %p60
    %p63 = scmp.ne.s32.totalorder %s48, %s62
    %p64 = scmp.eq.s32.totalorder %s17, 0
    %p65 = por %p63, %p64
    %s67 = sadd.s32 %s66, 1
    %p70 = scmp.eq.s32.totalorder %s11, 1
    %p71 = scmp.ne.s32.totalorder %s66, %s68
    %p72 = scmp.eq.s32.totalorder %s11, 0
    %p73 = por %p71, %p72
    %p74 = scmp.ne.s32.totalorder %s66, %s68
    %p75 = scmp.eq.s32.totalorder %s16, 1
    %p76 = por %p74, %p75
    %p77 = scmp.ne.s32.totalorder %s68, %s69
    %p78 = scmp.eq.s32.totalorder %s16, 0
    %p79 = por %p77, %p78
    %p80 = scmp.ne.s32.totalorder %s68, %s69
    %p81 = scmp.eq.s32.totalorder %s17, 1
    %p82 = por %p80, %p81
    %p84 = scmp.ne.s32.totalorder %s69, %s83
    %p85 = scmp.eq.s32.totalorder %s17, 0
    %p86 = por %p84, %p85
    %s88 = sadd.s32 %s87, 1
    %p91 = scmp.eq.s32.totalorder %s11, 1
    %p92 = scmp.ne.s32.totalorder %s87, %s89
    %p93 = scmp.eq.s32.totalorder %s11, 0
    %p94 = por %p92, %p93
    %p95 = scmp.ne.s32.totalorder %s87, %s89
    %p96 = scmp.eq.s32.totalorder %s16, 1
    %p97 = por %p95, %p96
    %p98 = scmp.ne.s32.totalorder %s89, %s90
    %p99 = scmp.eq.s32.totalorder %s16, 0
    %p100 = por %p98, %p99
    %p101 = scmp.ne.s32.totalorder %s89, %s90
    %p102 = scmp.eq.s32.totalorder %s17, 1
    %p103 = por %p101, %p102
    %p105 = scmp.ne.s32.totalorder %s90, %s104
    %p106 = scmp.eq.s32.totalorder %s17, 0
    %p107 = por %p105, %p106
    %s109 = sadd.s32 %s108, 1
    %p112 = scmp.eq.s32.totalorder %s11, 1
    %p113 = scmp.ne.s32.totalorder %s108, %s110
    %p114 = scmp.eq.s32.totalorder %s11, 0
    %p115 = por %p113, %p114
    %p116 = scmp.ne.s32.totalorder %s108, %s110
    %p117 = scmp.eq.s32.totalorder %s16, 1
    %p118 = por %p116, %p117
    %p119 = scmp.ne.s32.totalorder %s110, %s111
    %p120 = scmp.eq.s32.totalorder %s16, 0
    %p121 = por %p119, %p120
    %p122 = scmp.ne.s32.totalorder %s110, %s111
    %p123 = scmp.eq.s32.totalorder %s17, 1
    %p124 = por %p122, %p123
    %p126 = scmp.ne.s32.totalorder %s111, %s125
    %p127 = scmp.eq.s32.totalorder %s17, 0
    %p128 = por %p126, %p127
    %s129 = ssub.s32 %s11, %s18
    %p130 = scmp.eq.s32.totalorder %s129, 0
    %s132 = sadd.s32 %s131, 1
    %s133 = scalar_select %p130, %s131, %s132
    %p136 = pneg %p130
    %p137 = scmp.eq.s32.totalorder %s11, 1
    %p138 = por %p136, %p137
    %p139 = scmp.ne.s32.totalorder %s131, %s134
    %p140 = scmp.eq.s32.totalorder %s11, 0
    %p141 = por %p139, %p140
    %p142 = scmp.ne.s32.totalorder %s131, %s134
    %p143 = scmp.eq.s32.totalorder %s16, 1
    %p144 = por %p142, %p143
    %p145 = scmp.ne.s32.totalorder %s134, %s135
    %p146 = scmp.eq.s32.totalorder %s16, 0
    %p147 = por %p145, %p146
    %p148 = scmp.ne.s32.totalorder %s134, %s135
    %p149 = scmp.eq.s32.totalorder %s17, 1
    %p150 = por %p148, %p149
    %p152 = scmp.ne.s32.totalorder %s135, %s151
    %p153 = scmp.eq.s32.totalorder %s17, 0
    %p154 = por %p152, %p153
    %p155 = scmp.le.s32.totalorder 1, %s11
    %p156 = scmp.lt.s32.totalorder %s11, 3
    %p157 = pnand %p155, %p156
    %p158 = pneg %p157
    // Predicated region
    $region9: #{basic_block_forward.1} parent=5 // pred_check
      _
    $region10: #{basic_block_forward.1} parent=5 // pred_check_branch
      %160 = sbr.rel (%p157) target = $region12
    $region11: #{basic_block_forward.1} parent=5 // pred_region
      %s161 = ssub.s32 %s11, 1
      // Predicated region
      $region13: #{basic_block_forward.1} parent=11 // pred_check
        %p162 = pneg %p58
      $region14: #{basic_block_forward.1} parent=11 // pred_check_branch
        %164 = sbr.rel (%p162) target = $region16
      $region15: #{basic_block_forward.1} parent=11 // pred_region
        _
      $region16: #{basic_block_forward.1} parent=11 // pred_fallthru
        _
      // Predicated region
      $region17: #{basic_block_forward.1} parent=11 // pred_check
        %p165 = pneg %p79
      $region18: #{basic_block_forward.1} parent=11 // pred_check_branch
        %167 = sbr.rel (%p165) target = $region20
      $region19: #{basic_block_forward.1} parent=11 // pred_region
        _
      $region20: #{basic_block_forward.1} parent=11 // pred_fallthru
        _
      // Predicated region
      $region21: #{basic_block_forward.1} parent=11 // pred_check
        %p168 = pneg %p100
      $region22: #{basic_block_forward.1} parent=11 // pred_check_branch
        %170 = sbr.rel (%p168) target = $region24
      $region23: #{basic_block_forward.1} parent=11 // pred_region
        _
      $region24: #{basic_block_forward.1} parent=11 // pred_fallthru
        _
      // Predicated region
      $region25: #{basic_block_forward.1} parent=11 // pred_check
        %p171 = pneg %p121
      $region26: #{basic_block_forward.1} parent=11 // pred_check_branch
        %173 = sbr.rel (%p171) target = $region28
      $region27: #{basic_block_forward.1} parent=11 // pred_region
        _
      $region28: #{basic_block_forward.1} parent=11 // pred_fallthru
        _
    $region12: #{basic_block_forward.1} parent=5 // pred_fallthru
      _
    %p174 = scmp.lt.s32.totalorder %s11, 2
    // Predicated region
    $region29: #{basic_block_forward.1} parent=5 // pred_check
      %p175 = pneg %p174
    $region30: #{basic_block_forward.1} parent=5 // pred_check_branch
      %177 = sbr.rel (%p175) target = $region32
    $region31: #{basic_block_forward.1} parent=5 // pred_region
      // Predicated region
      $region33: #{basic_block_forward.1} parent=31 // pred_check
        %p178 = pneg %p31
      $region34: #{basic_block_forward.1} parent=31 // pred_check_branch
        %180 = sbr.rel (%p178) target = $region36
      $region35: #{basic_block_forward.1} parent=31 // pred_region
        %s181 = smul.u32 4, %s11
        %p182 = scmp.lt.s32.totalorder %s181, 7
        %s183 = scalar_select %p182, %s181, 7
        %s184 = smul.addr %s183, 2
        %s185 = smul.addr %s184, 8
        %s186 = scalar_lea.vmem %s0, %s185
        %s187 = smul.u32 4, %s11
      $region36: #{basic_block_forward.1} parent=31 // pred_fallthru
        _
    $region32: #{basic_block_forward.1} parent=5 // pred_fallthru
      _
    %p188 = scmp.le.s32.totalorder 1, %s11
    %p189 = scmp.lt.s32.totalorder %s11, 3
    %p190 = pnand %p188, %p189
    %p191 = pneg %p190
    // Predicated region
    $region37: #{basic_block_forward.1} parent=5 // pred_check
      _
    $region38: #{basic_block_forward.1} parent=5 // pred_check_branch
      %193 = sbr.rel (%p190) target = $region40
    $region39: #{basic_block_forward.1} parent=5 // pred_region
      %s194 = ssub.s32 %s11, 1
      %s195 = smul.u32 4, %s16
      %p196 = scmp.lt.s32.totalorder %s195, 7
      %s197 = scalar_select %p196, %s195, 7
      %s198 = smul.addr %s197, 2
      %s199 = smul.addr %s198, 8
      %s200 = scalar_lea.vmem %s0, %s199
      %p201 = pneg %p37
      %p202 = pneg %p34
      %p203 = pneg %p58
      %p204 = pneg %p55
      %p205 = pneg %p79
      %p206 = pneg %p76
      %p207 = pneg %p100
      %p208 = pneg %p97
      %p209 = pneg %p121
      %p210 = pneg %p118
      %p211 = pneg %p147
      %p212 = pneg %p144
      %s213 = smul.u32 4, %s16
      %p214 = scmp.lt.s32.totalorder %s213, 7
      %s215 = scalar_select %p214, %s213, 7
      %s216 = smul.addr %s215, 2
      %s217 = smul.addr %s216, 8
      %s218 = scalar_lea.vmem %s5, %s217
      %s219 = smul.u32 4, %s16
      %p220 = scmp.lt.s32.totalorder %s219, 7
      %s221 = scalar_select %p220, %s219, 7
      %s222 = smul.addr %s221, 2
      %s223 = smul.addr %s222, 8
      %s224 = scalar_lea.vmem %s0, %s223
      %s225 = smul.u32 4, %s16
      %s226 = smul.u32 4, %s16
      %p227 = scmp.lt.s32.totalorder %s226, 7
      %s228 = scalar_select %p227, %s226, 7
      %s229 = smul.addr %s228, 2
      %s230 = smul.addr %s229, 8
      %s231 = scalar_lea.vmem %s5, %s230
      %s232 = smul.u32 4, %s16
      %v234 = vld [vmem:[%s224] sm:$0xff]
      %v235 = vld [vmem:[%s224 + $0x8] sm:$0xff]
      %v236 = vld [vmem:[%s224 + $0x10] sm:$0xff]
      %v237 = vld [vmem:[%s224 + $0x18] sm:$0xff]
      %v238 = vld [vmem:[%s224 + $0x20] sm:$0xff]
      %v239 = vld [vmem:[%s224 + $0x28] sm:$0xff]
      %v240 = vld [vmem:[%s224 + $0x30] sm:$0xff]
      %v241 = vld [vmem:[%s224 + $0x38] sm:$0xff]
      %v242 = vlaneseq
      %v243 = vshrl.u32 %v242, 7
      %v244 = vadd.s32 %v243, 8
      %v245 = vadd.s32 %v243, 16
      %v246 = vadd.s32 %v243, 24
      %v247 = vadd.s32 %v243, 32
      %v248 = vadd.s32 %v243, 40
      %v249 = vadd.s32 %v243, 48
      %v250 = vadd.s32 %v243, 56
      %vm251 = vcmp.lt.s32.totalorder %v243, 0
      %v252 = vsub.s32 0, %v243
      %v253 = vsel %vm251, %v252, %v243
      %v254 = vshrl.u32 %v253, 4
      %v255 = vand.u32 %v253, 15
      %v256 = vsub.s32 0, %v255
      %v257 = vsel %vm251, %v256, %v255
      %vm258 = vcmp.lt.s32.totalorder %v244, 0
      %v259 = vsub.s32 0, %v244
      %v260 = vsel %vm258, %v259, %v244
      %v261 = vshrl.u32 %v260, 4
      %v262 = vand.u32 %v260, 15
      %v263 = vsub.s32 0, %v262
      %v264 = vsel %vm258, %v263, %v262
      %vm265 = vcmp.lt.s32.totalorder %v245, 0
      %v266 = vsub.s32 0, %v245
      %v267 = vsel %vm265, %v266, %v245
      %v268 = vshrl.u32 %v267, 4
      %v269 = vand.u32 %v267, 15
      %v270 = vsub.s32 0, %v269
      %v271 = vsel %vm265, %v270, %v269
      %vm272 = vcmp.lt.s32.totalorder %v246, 0
      %v273 = vsub.s32 0, %v246
      %v274 = vsel %vm272, %v273, %v246
      %v275 = vshrl.u32 %v274, 4
      %v276 = vand.u32 %v274, 15
      %v277 = vsub.s32 0, %v276
      %v278 = vsel %vm272, %v277, %v276
      %vm279 = vcmp.lt.s32.totalorder %v247, 0
      %v280 = vsub.s32 0, %v247
      %v281 = vsel %vm279, %v280, %v247
      %v282 = vshrl.u32 %v281, 4
      %v283 = vand.u32 %v281, 15
      %v284 = vsub.s32 0, %v283
      %v285 = vsel %vm279, %v284, %v283
      %vm286 = vcmp.lt.s32.totalorder %v248, 0
      %v287 = vsub.s32 0, %v248
      %v288 = vsel %vm286, %v287, %v248
      %v289 = vshrl.u32 %v288, 4
      %v290 = vand.u32 %v288, 15
      %v291 = vsub.s32 0, %v290
      %v292 = vsel %vm286, %v291, %v290
      %vm293 = vcmp.lt.s32.totalorder %v249, 0
      %v294 = vsub.s32 0, %v249
      %v295 = vsel %vm293, %v294, %v249
      %v296 = vshrl.u32 %v295, 4
      %v297 = vand.u32 %v295, 15
      %v298 = vsub.s32 0, %v297
      %v299 = vsel %vm293, %v298, %v297
      %vm300 = vcmp.lt.s32.totalorder %v250, 0
      %v301 = vsub.s32 0, %v250
      %v302 = vsel %vm300, %v301, %v250
      %v303 = vshrl.u32 %v302, 4
      %v304 = vand.u32 %v302, 15
      %v305 = vsub.s32 0, %v304
      %v306 = vsel %vm300, %v305, %v304
      %vm307 = vcmp.ne.s32.totalorder %v257, 0
      %vm308 = vcmp.ne.s32.totalorder %v264, 0
      %vm309 = vcmp.ne.s32.totalorder %v271, 0
      %vm310 = vcmp.ne.s32.totalorder %v278, 0
      %vm311 = vcmp.ne.s32.totalorder %v285, 0
      %vm312 = vcmp.ne.s32.totalorder %v292, 0
      %vm313 = vcmp.ne.s32.totalorder %v299, 0
      %vm314 = vcmp.ne.s32.totalorder %v306, 0
      %vm315 = vcmp.lt.s32.totalorder %v257, 0
      %vm316 = vcmp.lt.s32.totalorder %v264, 0
      %vm317 = vcmp.lt.s32.totalorder %v271, 0
      %vm318 = vcmp.lt.s32.totalorder %v278, 0
      %vm319 = vcmp.lt.s32.totalorder %v285, 0
      %vm320 = vcmp.lt.s32.totalorder %v292, 0
      %vm321 = vcmp.lt.s32.totalorder %v299, 0
      %vm322 = vcmp.lt.s32.totalorder %v306, 0
      %vm323 = vmand %vm315, %vm307
      %vm324 = vmand %vm316, %vm308
      %vm325 = vmand %vm317, %vm309
      %vm326 = vmand %vm318, %vm310
      %vm327 = vmand %vm319, %vm311
      %vm328 = vmand %vm320, %vm312
      %vm329 = vmand %vm321, %vm313
      %vm330 = vmand %vm322, %vm314
      %v331 = vadd.s32 %v257, 16
      %v332 = vadd.s32 %v264, 16
      %v333 = vadd.s32 %v271, 16
      %v334 = vadd.s32 %v278, 16
      %v335 = vadd.s32 %v285, 16
      %v336 = vadd.s32 %v292, 16
      %v337 = vadd.s32 %v299, 16
      %v338 = vadd.s32 %v306, 16
      %v339 = vsel %vm323, %v331, %v257
      %v340 = vsel %vm324, %v332, %v264
      %v341 = vsel %vm325, %v333, %v271
      %v342 = vsel %vm326, %v334, %v278
      %v343 = vsel %vm327, %v335, %v285
      %v344 = vsel %vm328, %v336, %v292
      %v345 = vsel %vm329, %v337, %v299
      %v346 = vsel %vm330, %v338, %v306
      %vm347 = vcmp.eq.s32.totalorder %v339, 0
      %vm348 = vcmp.eq.s32.totalorder %v340, 0
      %vm349 = vcmp.eq.s32.totalorder %v341, 0
      %vm350 = vcmp.eq.s32.totalorder %v342, 0
      %vm351 = vcmp.eq.s32.totalorder %v343, 0
      %vm352 = vcmp.eq.s32.totalorder %v344, 0
      %vm353 = vcmp.eq.s32.totalorder %v345, 0
      %vm354 = vcmp.eq.s32.totalorder %v346, 0
      %vm355 = vcmp.eq.s32.totalorder %v339, 15
      %vm356 = vcmp.eq.s32.totalorder %v340, 15
      %vm357 = vcmp.eq.s32.totalorder %v341, 15
      %vm358 = vcmp.eq.s32.totalorder %v342, 15
      %vm359 = vcmp.eq.s32.totalorder %v343, 15
      %vm360 = vcmp.eq.s32.totalorder %v344, 15
      %vm361 = vcmp.eq.s32.totalorder %v345, 15
      %vm362 = vcmp.eq.s32.totalorder %v346, 15
      %v363 = vrot.slane %v234, 7
      %v364 = vrot.slane %v235, 7
      %v365 = vrot.slane %v236, 7
      %v366 = vrot.slane %v237, 7
      %v367 = vrot.slane %v238, 7
      %v368 = vrot.slane %v239, 7
      %v369 = vrot.slane %v240, 7
      %v370 = vrot.slane %v241, 7
      %vm371 = vcmp.lt.s32.totalorder %v243, 1
      %v372 = vsel %vm371, %v369, %v370
      %v373 = vsel %vm371, %v368, %v369
      %v374 = vsel %vm371, %v367, %v368
      %v375 = vsel %vm371, %v366, %v367
      %v376 = vsel %vm371, %v365, %v366
      %v377 = vsel %vm371, %v364, %v365
      %v378 = vsel %vm371, %v363, %v364
      %v379 = vsel %vm371, %v370, %v363
      %v380 = vsel %vm347, 0.0, %v379
      %v381 = vsel %vm348, 0.0, %v378
      %v382 = vsel %vm349, 0.0, %v377
      %v383 = vsel %vm350, 0.0, %v376
      %v384 = vsel %vm351, 0.0, %v375
      %v385 = vsel %vm352, 0.0, %v374
      %v386 = vsel %vm353, 0.0, %v373
      %v387 = vsel %vm354, 0.0, %v372
      %v388 = vrot.slane %v234, 1
      %v389 = vrot.slane %v235, 1
      %v390 = vrot.slane %v236, 1
      %v391 = vrot.slane %v237, 1
      %v392 = vrot.slane %v238, 1
      %v393 = vrot.slane %v239, 1
      %v394 = vrot.slane %v240, 1
      %v395 = vrot.slane %v241, 1
      %vm396 = vcmp.lt.s32.totalorder %v243, 7
      %v397 = vsel %vm396, %v394, %v395
      %v398 = vsel %vm396, %v393, %v394
      %v399 = vsel %vm396, %v392, %v393
      %v400 = vsel %vm396, %v391, %v392
      %v401 = vsel %vm396, %v390, %v391
      %v402 = vsel %vm396, %v389, %v390
      %v403 = vsel %vm396, %v388, %v389
      %v404 = vsel %vm396, %v395, %v388
      %v405 = vsel %vm355, 0.0, %v403
      %v406 = vsel %vm356, 0.0, %v402
      %v407 = vsel %vm357, 0.0, %v401
      %v408 = vsel %vm358, 0.0, %v400
      %v409 = vsel %vm359, 0.0, %v399
      %v410 = vsel %vm360, 0.0, %v398
      %v411 = vsel %vm361, 0.0, %v397
      %v412 = vsel %vm362, 0.0, %v404
      %v413 = vpack.c.bf16 %v381, %v380
      %v414 = vpack.c.bf16 %v235, %v234
      %v415 = vpack.c.bf16 %v406, %v405
      %v416 = vpack.c.bf16 %v383, %v382
      %v417 = vpack.c.bf16 %v237, %v236
      %v418 = vpack.c.bf16 %v408, %v407
      %v419 = vpack.c.bf16 %v385, %v384
      %v420 = vpack.c.bf16 %v239, %v238
      %v421 = vpack.c.bf16 %v410, %v409
      %v422 = vpack.c.bf16 %v387, %v386
      %v423 = vpack.c.bf16 %v241, %v240
      %v424 = vpack.c.bf16 %v412, %v411
      %v425 = vld [vmem:[%s1] sm:$0xf]
      %v426 = vld [vmem:[%s1 + $0x4] sm:$0xf]
      %v427 = vld [vmem:[%s1 + $0x8] sm:$0xf]
      %v428 = vld [vmem:[%s1 + $0xc] sm:$0xf]
      %v429 = vld [vmem:[%s1 + $0x10] sm:$0xf]
      %v430 = vld [vmem:[%s1 + $0x14] sm:$0xf]
      %v431 = vld [vmem:[%s1 + $0x18] sm:$0xf]
      %v432 = vld [vmem:[%s1 + $0x1c] sm:$0xf]
      %v433 = vld [vmem:[%s1 + $0x20] sm:$0xf]
      %v434 = vld [vmem:[%s1 + $0x24] sm:$0xf]
      %v435 = vld [vmem:[%s1 + $0x28] sm:$0xf]
      %v436 = vld [vmem:[%s1 + $0x2c] sm:$0xf]
      %v437 = vld [vmem:[%s1 + $0x30] sm:$0xf]
      %v438 = vld [vmem:[%s1 + $0x34] sm:$0xf]
      %v439 = vld [vmem:[%s1 + $0x38] sm:$0xf]
      %v440 = vld [vmem:[%s1 + $0x3c] sm:$0xf]
      %v441 = vld [vmem:[%s1 + $0x40] sm:$0xf]
      %v442 = vld [vmem:[%s1 + $0x44] sm:$0xf]
      %v443 = vld [vmem:[%s1 + $0x48] sm:$0xf]
      %v444 = vld [vmem:[%s1 + $0x4c] sm:$0xf]
      %v445 = vld [vmem:[%s1 + $0x50] sm:$0xf]
      %v446 = vld [vmem:[%s1 + $0x54] sm:$0xf]
      %v447 = vld [vmem:[%s1 + $0x58] sm:$0xf]
      %v448 = vld [vmem:[%s1 + $0x5c] sm:$0xf]
      %v449 = vld [vmem:[%s1 + $0x60] sm:$0xf]
      %v450 = vld [vmem:[%s1 + $0x64] sm:$0xf]
      %v451 = vld [vmem:[%s1 + $0x68] sm:$0xf]
      %v452 = vld [vmem:[%s1 + $0x6c] sm:$0xf]
      %v453 = vld [vmem:[%s1 + $0x70] sm:$0xf]
      %v454 = vld [vmem:[%s1 + $0x74] sm:$0xf]
      %v455 = vld [vmem:[%s1 + $0x78] sm:$0xf]
      %v456 = vld [vmem:[%s1 + $0x7c] sm:$0xf]
      %v457 = vld [vmem:[%s1 + $0x80] sm:$0xf]
      %v458 = vld [vmem:[%s1 + $0x84] sm:$0xf]
      %v459 = vld [vmem:[%s1 + $0x88] sm:$0xf]
      %v460 = vld [vmem:[%s1 + $0x8c] sm:$0xf]
      %v461 = vld [vmem:[%s1 + $0x90] sm:$0xf]
      %v462 = vld [vmem:[%s1 + $0x94] sm:$0xf]
      %v463 = vld [vmem:[%s1 + $0x98] sm:$0xf]
      %v464 = vld [vmem:[%s1 + $0x9c] sm:$0xf]
      %v465 = vld [vmem:[%s1 + $0xa0] sm:$0xf]
      %v466 = vld [vmem:[%s1 + $0xa4] sm:$0xf]
      %v467 = vld [vmem:[%s1 + $0xa8] sm:$0xf]
      %v468 = vld [vmem:[%s1 + $0xac] sm:$0xf]
      %v469 = vld [vmem:[%s1 + $0xb0] sm:$0xf]
      %v470 = vld [vmem:[%s1 + $0xb4] sm:$0xf]
      %v471 = vld [vmem:[%s1 + $0xb8] sm:$0xf]
      %v472 = vld [vmem:[%s1 + $0xbc] sm:$0xf]
      %v473 = vld [vmem:[%s2] sm:$0x1]
      %v475 = vlaneseq
      %v476 = vshrl.u32 %v475, 7
      %v477 = vsub.s32 0, %v476
      %v478 = vrot.slane %v473, %v477
      %v528 = vunpack.c.l.b16 %v425
      %v529 = vunpack.c.l.b16 %v426
      %v530 = vunpack.c.l.b16 %v427
      %v531 = vunpack.c.l.b16 %v428
      %v532 = vunpack.c.l.b16 %v429
      %v533 = vunpack.c.l.b16 %v430
      %v534 = vunpack.c.l.b16 %v431
      %v535 = vunpack.c.l.b16 %v432
      %v536 = vunpack.c.l.b16 %v433
      %v537 = vunpack.c.l.b16 %v434
      %v538 = vunpack.c.l.b16 %v435
      %v539 = vunpack.c.l.b16 %v436
      %v540 = vunpack.c.l.b16 %v437
      %v541 = vunpack.c.l.b16 %v438
      %v542 = vunpack.c.l.b16 %v439
      %v543 = vunpack.c.l.b16 %v440
      %v544 = vunpack.c.l.b16 %v441
      %v545 = vunpack.c.l.b16 %v442
      %v546 = vunpack.c.l.b16 %v443
      %v547 = vunpack.c.l.b16 %v444
      %v548 = vunpack.c.l.b16 %v445
      %v549 = vunpack.c.l.b16 %v446
      %v550 = vunpack.c.l.b16 %v447
      %v551 = vunpack.c.l.b16 %v448
      %v552 = vunpack.c.l.b16 %v449
      %v553 = vunpack.c.l.b16 %v450
      %v554 = vunpack.c.l.b16 %v451
      %v555 = vunpack.c.l.b16 %v452
      %v556 = vunpack.c.l.b16 %v453
      %v557 = vunpack.c.l.b16 %v454
      %v558 = vunpack.c.l.b16 %v455
      %v559 = vunpack.c.l.b16 %v456
      %v560 = vunpack.c.l.b16 %v457
      %v561 = vunpack.c.l.b16 %v458
      %v562 = vunpack.c.l.b16 %v459
      %v563 = vunpack.c.l.b16 %v460
      %v564 = vunpack.c.l.b16 %v461
      %v565 = vunpack.c.l.b16 %v462
      %v566 = vunpack.c.l.b16 %v463
      %v567 = vunpack.c.l.b16 %v464
      %v568 = vunpack.c.l.b16 %v465
      %v569 = vunpack.c.l.b16 %v466
      %v570 = vunpack.c.l.b16 %v467
      %v571 = vunpack.c.l.b16 %v468
      %v572 = vunpack.c.l.b16 %v469
      %v573 = vunpack.c.l.b16 %v470
      %v574 = vunpack.c.l.b16 %v471
      %v575 = vunpack.c.l.b16 %v472
      %v576 = vpack.c.b16 %v529, %v528
      %v577 = vpack.c.b16 %v531, %v530
      %v578 = vpack.c.b16 %v533, %v532
      %v579 = vpack.c.b16 %v535, %v534
      %v580 = vpack.c.b16 %v537, %v536
      %v581 = vpack.c.b16 %v539, %v538
      %v582 = vpack.c.b16 %v541, %v540
      %v583 = vpack.c.b16 %v543, %v542
      %v584 = vpack.c.b16 %v545, %v544
      %v585 = vpack.c.b16 %v547, %v546
      %v586 = vpack.c.b16 %v549, %v548
      %v587 = vpack.c.b16 %v551, %v550
      %v588 = vpack.c.b16 %v553, %v552
      %v589 = vpack.c.b16 %v555, %v554
      %v590 = vpack.c.b16 %v557, %v556
      %v591 = vpack.c.b16 %v559, %v558
      %v592 = vpack.c.b16 %v561, %v560
      %v593 = vpack.c.b16 %v563, %v562
      %v594 = vpack.c.b16 %v565, %v564
      %v595 = vpack.c.b16 %v567, %v566
      %v596 = vpack.c.b16 %v569, %v568
      %v597 = vpack.c.b16 %v571, %v570
      %v598 = vpack.c.b16 %v573, %v572
      %v599 = vpack.c.b16 %v575, %v574
      %624 = vmatprep.subr.bf16.mxu0 0
      %625 = vmatpush1.bf16.msra.mxu0 %v583
      %626 = vmatprep.subr.bf16.mxu0 0
      %627 = vmatpush1.bf16.msra.mxu0 %v582
      %628 = vmatprep.subr.bf16.mxu0 0
      %629 = vmatpush1.bf16.msra.mxu0 %v581
      %630 = vmatprep.subr.bf16.mxu0 0
      %631 = vmatpush1.bf16.msra.mxu0 %v580
      %632 = vmatprep.subr.bf16.mxu0 0
      %633 = vmatpush1.bf16.msra.mxu0 %v579
      %634 = vmatprep.subr.bf16.mxu0 0
      %635 = vmatpush1.bf16.msra.mxu0 %v578
      %636 = vmatprep.subr.bf16.mxu0 0
      %637 = vmatpush1.bf16.msra.mxu0 %v577
      %638 = vmatprep.subr.bf16.mxu0 0
      %639 = vmatpush1.bf16.msra.mxu0 %v576
      %640 = vmatprep.subr.bf16.mxu0 0
      %641 = vmatpush2.bf16.msra.mxu0 %v591
      %642 = vmatprep.subr.bf16.mxu0 0
      %643 = vmatpush2.bf16.msra.mxu0 %v590
      %644 = vmatprep.subr.bf16.mxu0 0
      %645 = vmatpush2.bf16.msra.mxu0 %v589
      %646 = vmatprep.subr.bf16.mxu0 0
      %647 = vmatpush2.bf16.msra.mxu0 %v588
      %648 = vmatprep.subr.bf16.mxu0 0
      %649 = vmatpush2.bf16.msra.mxu0 %v587
      %650 = vmatprep.subr.bf16.mxu0 0
      %651 = vmatpush2.bf16.msra.mxu0 %v586
      %652 = vmatprep.subr.bf16.mxu0 0
      %653 = vmatpush2.bf16.msra.mxu0 %v585
      %654 = vmatprep.subr.bf16.mxu0 0
      %655 = vmatpush2.bf16.msra.mxu0 %v584
      %656 = vmatprep.mubr.bf16.mxu0 %v414
      %657 = vmatmul.mubr.bf16.gmra.mxu0 %v413
      %v658 = vpop.f32.mrf.mxu0
      %v659 = vadd.f32 %v478, %v658
      %v660 = vpop.f32.mrf.mxu0
      %v661 = vpop.f32.mrf.mxu0
      %v662 = vadd.f32 %v478, %v661
      %v663 = vpop.f32.mrf.mxu0
      %664 = vmatprep.mubr.bf16.mxu0 %v417
      %665 = vmatmul.mubr.bf16.gmra.mxu0 %v416
      %v666 = vpop.f32.mrf.mxu0
      %v667 = vadd.f32 %v478, %v666
      %v668 = vpop.f32.mrf.mxu0
      %v669 = vpop.f32.mrf.mxu0
      %v670 = vadd.f32 %v478, %v669
      %v671 = vpop.f32.mrf.mxu0
      %672 = vmatprep.mubr.bf16.mxu0 %v420
      %673 = vmatmul.mubr.bf16.gmra.mxu0 %v419
      %v674 = vpop.f32.mrf.mxu0
      %v675 = vadd.f32 %v478, %v674
      %v676 = vpop.f32.mrf.mxu0
      %v677 = vpop.f32.mrf.mxu0
      %v678 = vadd.f32 %v478, %v677
      %v679 = vpop.f32.mrf.mxu0
      %680 = vmatprep.mubr.bf16.mxu0 %v423
      %681 = vmatmul.mubr.bf16.gmra.mxu0 %v422
      %v682 = vpop.f32.mrf.mxu0
      %v683 = vadd.f32 %v478, %v682
      %v684 = vpop.f32.mrf.mxu0
      %v685 = vpop.f32.mrf.mxu0
      %v686 = vadd.f32 %v478, %v685
      %v687 = vpop.f32.mrf.mxu0
      %688 = vdwg.mxu0
      %689 = vmatprep.subr.bf16.mxu0 0
      %690 = vmatpush1.bf16.msra.mxu0 %v599
      %691 = vmatprep.subr.bf16.mxu0 0
      %692 = vmatpush1.bf16.msra.mxu0 %v598
      %693 = vmatprep.subr.bf16.mxu0 0
      %694 = vmatpush1.bf16.msra.mxu0 %v597
      %695 = vmatprep.subr.bf16.mxu0 0
      %696 = vmatpush1.bf16.msra.mxu0 %v596
      %697 = vmatprep.subr.bf16.mxu0 0
      %698 = vmatpush1.bf16.msra.mxu0 %v595
      %699 = vmatprep.subr.bf16.mxu0 0
      %700 = vmatpush1.bf16.msra.mxu0 %v594
      %701 = vmatprep.subr.bf16.mxu0 0
      %702 = vmatpush1.bf16.msra.mxu0 %v593
      %703 = vmatprep.subr.bf16.mxu0 0
      %704 = vmatpush1.bf16.msra.mxu0 %v592
      %705 = vmatprep.subr.bf16.mxu0 0
      %706 = vmatpush2.bf16.msra.mxu0 0
      %707 = vmatprep.subr.bf16.mxu0 0
      %708 = vmatpush2.bf16.msra.mxu0 0
      %709 = vmatprep.subr.bf16.mxu0 0
      %710 = vmatpush2.bf16.msra.mxu0 0
      %711 = vmatprep.subr.bf16.mxu0 0
      %712 = vmatpush2.bf16.msra.mxu0 0
      %713 = vmatprep.subr.bf16.mxu0 0
      %714 = vmatpush2.bf16.msra.mxu0 0
      %715 = vmatprep.subr.bf16.mxu0 0
      %716 = vmatpush2.bf16.msra.mxu0 0
      %717 = vmatprep.subr.bf16.mxu0 0
      %718 = vmatpush2.bf16.msra.mxu0 0
      %719 = vmatprep.subr.bf16.mxu0 0
      %720 = vmatpush2.bf16.msra.mxu0 0
      %721 = vmatprep.mubr.bf16.mxu0 0
      %722 = vmatmul.mubr.bf16.gmra.mxu0 %v415
      %v723 = vpop.f32.mrf.mxu0
      %v724 = vadd.f32 %v659, %v723
      %v725 = vpop.f32.mrf.mxu0
      %v726 = vpop.f32.mrf.mxu0
      %v727 = vadd.f32 %v662, %v726
      %v728 = vpop.f32.mrf.mxu0
      %729 = vmatprep.mubr.bf16.mxu0 0
      %730 = vmatmul.mubr.bf16.gmra.mxu0 %v418
      %v731 = vpop.f32.mrf.mxu0
      %v732 = vadd.f32 %v667, %v731
      %v733 = vpop.f32.mrf.mxu0
      %v734 = vpop.f32.mrf.mxu0
      %v735 = vadd.f32 %v670, %v734
      %v736 = vpop.f32.mrf.mxu0
      %737 = vmatprep.mubr.bf16.mxu0 0
      %738 = vmatmul.mubr.bf16.gmra.mxu0 %v421
      %v739 = vpop.f32.mrf.mxu0
      %v740 = vadd.f32 %v675, %v739
      %v741 = vpop.f32.mrf.mxu0
      %v742 = vpop.f32.mrf.mxu0
      %v743 = vadd.f32 %v678, %v742
      %v744 = vpop.f32.mrf.mxu0
      %745 = vmatprep.mubr.bf16.mxu0 0
      %746 = vmatmul.mubr.bf16.gmra.mxu0 %v424
      %v747 = vpop.f32.mrf.mxu0
      %v748 = vadd.f32 %v683, %v747
      %v749 = vpop.f32.mrf.mxu0
      %v750 = vpop.f32.mrf.mxu0
      %v751 = vadd.f32 %v686, %v750
      %v752 = vpop.f32.mrf.mxu0
      %753 = vdwg.mxu0
      %v754 = vmax.f32 %v724, 0.0
      %v755 = vmax.f32 %v727, 0.0
      %v756 = vmax.f32 %v732, 0.0
      %v757 = vmax.f32 %v735, 0.0
      %v758 = vmax.f32 %v740, 0.0
      %v759 = vmax.f32 %v743, 0.0
      %v760 = vmax.f32 %v748, 0.0
      %v761 = vmax.f32 %v751, 0.0
      %v762 = vrot.slane %v754, 7
      %v763 = vrot.slane %v755, 7
      %v764 = vrot.slane %v756, 7
      %v765 = vrot.slane %v757, 7
      %v766 = vrot.slane %v758, 7
      %v767 = vrot.slane %v759, 7
      %v768 = vrot.slane %v760, 7
      %v769 = vrot.slane %v761, 7
      %v770 = vsel %vm371, %v768, %v769
      %v771 = vsel %vm371, %v767, %v768
      %v772 = vsel %vm371, %v766, %v767
      %v773 = vsel %vm371, %v765, %v766
      %v774 = vsel %vm371, %v764, %v765
      %v775 = vsel %vm371, %v763, %v764
      %v776 = vsel %vm371, %v762, %v763
      %v777 = vsel %vm371, %v769, %v762
      %v778 = vsel %vm347, 0.0, %v777
      %v779 = vsel %vm348, 0.0, %v776
      %v780 = vsel %vm349, 0.0, %v775
      %v781 = vsel %vm350, 0.0, %v774
      %v782 = vsel %vm351, 0.0, %v773
      %v783 = vsel %vm352, 0.0, %v772
      %v784 = vsel %vm353, 0.0, %v771
      %v785 = vsel %vm354, 0.0, %v770
      %v786 = vrot.slane %v754, 1
      %v787 = vrot.slane %v755, 1
      %v788 = vrot.slane %v756, 1
      %v789 = vrot.slane %v757, 1
      %v790 = vrot.slane %v758, 1
      %v791 = vrot.slane %v759, 1
      %v792 = vrot.slane %v760, 1
      %v793 = vrot.slane %v761, 1
      %v794 = vsel %vm396, %v792, %v793
      %v795 = vsel %vm396, %v791, %v792
      %v796 = vsel %vm396, %v790, %v791
      %v797 = vsel %vm396, %v789, %v790
      %v798 = vsel %vm396, %v788, %v789
      %v799 = vsel %vm396, %v787, %v788
      %v800 = vsel %vm396, %v786, %v787
      %v801 = vsel %vm396, %v793, %v786
      %v802 = vsel %vm355, 0.0, %v800
      %v803 = vsel %vm356, 0.0, %v799
      %v804 = vsel %vm357, 0.0, %v798
      %v805 = vsel %vm358, 0.0, %v797
      %v806 = vsel %vm359, 0.0, %v796
      %v807 = vsel %vm360, 0.0, %v795
      %v808 = vsel %vm361, 0.0, %v794
      %v809 = vsel %vm362, 0.0, %v801
      %v810 = vpack.c.bf16 %v779, %v778
      %v811 = vpack.c.bf16 %v755, %v754
      %v812 = vpack.c.bf16 %v803, %v802
      %v813 = vpack.c.bf16 %v781, %v780
      %v814 = vpack.c.bf16 %v757, %v756
      %v815 = vpack.c.bf16 %v805, %v804
      %v816 = vpack.c.bf16 %v783, %v782
      %v817 = vpack.c.bf16 %v759, %v758
      %v818 = vpack.c.bf16 %v807, %v806
      %v819 = vpack.c.bf16 %v785, %v784
      %v820 = vpack.c.bf16 %v761, %v760
      %v821 = vpack.c.bf16 %v809, %v808
      %v822 = vld [vmem:[%s3] sm:$0xf]
      %v823 = vld [vmem:[%s3 + $0x4] sm:$0xf]
      %v824 = vld [vmem:[%s3 + $0x8] sm:$0xf]
      %v825 = vld [vmem:[%s3 + $0xc] sm:$0xf]
      %v826 = vld [vmem:[%s3 + $0x10] sm:$0xf]
      %v827 = vld [vmem:[%s3 + $0x14] sm:$0xf]
      %v828 = vld [vmem:[%s3 + $0x18] sm:$0xf]
      %v829 = vld [vmem:[%s3 + $0x1c] sm:$0xf]
      %v830 = vld [vmem:[%s3 + $0x20] sm:$0xf]
      %v831 = vld [vmem:[%s3 + $0x24] sm:$0xf]
      %v832 = vld [vmem:[%s3 + $0x28] sm:$0xf]
      %v833 = vld [vmem:[%s3 + $0x2c] sm:$0xf]
      %v834 = vld [vmem:[%s3 + $0x30] sm:$0xf]
      %v835 = vld [vmem:[%s3 + $0x34] sm:$0xf]
      %v836 = vld [vmem:[%s3 + $0x38] sm:$0xf]
      %v837 = vld [vmem:[%s3 + $0x3c] sm:$0xf]
      %v838 = vld [vmem:[%s3 + $0x40] sm:$0xf]
      %v839 = vld [vmem:[%s3 + $0x44] sm:$0xf]
      %v840 = vld [vmem:[%s3 + $0x48] sm:$0xf]
      %v841 = vld [vmem:[%s3 + $0x4c] sm:$0xf]
      %v842 = vld [vmem:[%s3 + $0x50] sm:$0xf]
      %v843 = vld [vmem:[%s3 + $0x54] sm:$0xf]
      %v844 = vld [vmem:[%s3 + $0x58] sm:$0xf]
      %v845 = vld [vmem:[%s3 + $0x5c] sm:$0xf]
      %v846 = vld [vmem:[%s3 + $0x60] sm:$0xf]
      %v847 = vld [vmem:[%s3 + $0x64] sm:$0xf]
      %v848 = vld [vmem:[%s3 + $0x68] sm:$0xf]
      %v849 = vld [vmem:[%s3 + $0x6c] sm:$0xf]
      %v850 = vld [vmem:[%s3 + $0x70] sm:$0xf]
      %v851 = vld [vmem:[%s3 + $0x74] sm:$0xf]
      %v852 = vld [vmem:[%s3 + $0x78] sm:$0xf]
      %v853 = vld [vmem:[%s3 + $0x7c] sm:$0xf]
      %v854 = vld [vmem:[%s3 + $0x80] sm:$0xf]
      %v855 = vld [vmem:[%s3 + $0x84] sm:$0xf]
      %v856 = vld [vmem:[%s3 + $0x88] sm:$0xf]
      %v857 = vld [vmem:[%s3 + $0x8c] sm:$0xf]
      %v858 = vld [vmem:[%s3 + $0x90] sm:$0xf]
      %v859 = vld [vmem:[%s3 + $0x94] sm:$0xf]
      %v860 = vld [vmem:[%s3 + $0x98] sm:$0xf]
      %v861 = vld [vmem:[%s3 + $0x9c] sm:$0xf]
      %v862 = vld [vmem:[%s3 + $0xa0] sm:$0xf]
      %v863 = vld [vmem:[%s3 + $0xa4] sm:$0xf]
      %v864 = vld [vmem:[%s3 + $0xa8] sm:$0xf]
      %v865 = vld [vmem:[%s3 + $0xac] sm:$0xf]
      %v866 = vld [vmem:[%s3 + $0xb0] sm:$0xf]
      %v867 = vld [vmem:[%s3 + $0xb4] sm:$0xf]
      %v868 = vld [vmem:[%s3 + $0xb8] sm:$0xf]
      %v869 = vld [vmem:[%s3 + $0xbc] sm:$0xf]
      %v870 = vld [vmem:[%s4] sm:$0x1]
      %v872 = vlaneseq
      %v873 = vshrl.u32 %v872, 7
      %v874 = vsub.s32 0, %v873
      %v875 = vrot.slane %v870, %v874
      %v925 = vunpack.c.l.b16 %v822
      %v926 = vunpack.c.l.b16 %v823
      %v927 = vunpack.c.l.b16 %v824
      %v928 = vunpack.c.l.b16 %v825
      %v929 = vunpack.c.l.b16 %v826
      %v930 = vunpack.c.l.b16 %v827
      %v931 = vunpack.c.l.b16 %v828
      %v932 = vunpack.c.l.b16 %v829
      %v933 = vunpack.c.l.b16 %v830
      %v934 = vunpack.c.l.b16 %v831
      %v935 = vunpack.c.l.b16 %v832
      %v936 = vunpack.c.l.b16 %v833
      %v937 = vunpack.c.l.b16 %v834
      %v938 = vunpack.c.l.b16 %v835
      %v939 = vunpack.c.l.b16 %v836
      %v940 = vunpack.c.l.b16 %v837
      %v941 = vunpack.c.l.b16 %v838
      %v942 = vunpack.c.l.b16 %v839
      %v943 = vunpack.c.l.b16 %v840
      %v944 = vunpack.c.l.b16 %v841
      %v945 = vunpack.c.l.b16 %v842
      %v946 = vunpack.c.l.b16 %v843
      %v947 = vunpack.c.l.b16 %v844
      %v948 = vunpack.c.l.b16 %v845
      %v949 = vunpack.c.l.b16 %v846
      %v950 = vunpack.c.l.b16 %v847
      %v951 = vunpack.c.l.b16 %v848
      %v952 = vunpack.c.l.b16 %v849
      %v953 = vunpack.c.l.b16 %v850
      %v954 = vunpack.c.l.b16 %v851
      %v955 = vunpack.c.l.b16 %v852
      %v956 = vunpack.c.l.b16 %v853
      %v957 = vunpack.c.l.b16 %v854
      %v958 = vunpack.c.l.b16 %v855
      %v959 = vunpack.c.l.b16 %v856
      %v960 = vunpack.c.l.b16 %v857
      %v961 = vunpack.c.l.b16 %v858
      %v962 = vunpack.c.l.b16 %v859
      %v963 = vunpack.c.l.b16 %v860
      %v964 = vunpack.c.l.b16 %v861
      %v965 = vunpack.c.l.b16 %v862
      %v966 = vunpack.c.l.b16 %v863
      %v967 = vunpack.c.l.b16 %v864
      %v968 = vunpack.c.l.b16 %v865
      %v969 = vunpack.c.l.b16 %v866
      %v970 = vunpack.c.l.b16 %v867
      %v971 = vunpack.c.l.b16 %v868
      %v972 = vunpack.c.l.b16 %v869
      %v973 = vpack.c.b16 %v926, %v925
      %v974 = vpack.c.b16 %v928, %v927
      %v975 = vpack.c.b16 %v930, %v929
      %v976 = vpack.c.b16 %v932, %v931
      %v977 = vpack.c.b16 %v934, %v933
      %v978 = vpack.c.b16 %v936, %v935
      %v979 = vpack.c.b16 %v938, %v937
      %v980 = vpack.c.b16 %v940, %v939
      %v981 = vpack.c.b16 %v942, %v941
      %v982 = vpack.c.b16 %v944, %v943
      %v983 = vpack.c.b16 %v946, %v945
      %v984 = vpack.c.b16 %v948, %v947
      %v985 = vpack.c.b16 %v950, %v949
      %v986 = vpack.c.b16 %v952, %v951
      %v987 = vpack.c.b16 %v954, %v953
      %v988 = vpack.c.b16 %v956, %v955
      %v989 = vpack.c.b16 %v958, %v957
      %v990 = vpack.c.b16 %v960, %v959
      %v991 = vpack.c.b16 %v962, %v961
      %v992 = vpack.c.b16 %v964, %v963
      %v993 = vpack.c.b16 %v966, %v965
      %v994 = vpack.c.b16 %v968, %v967
      %v995 = vpack.c.b16 %v970, %v969
      %v996 = vpack.c.b16 %v972, %v971
      %1021 = vmatprep.subr.bf16.mxu0 0
      %1022 = vmatpush1.bf16.msra.mxu0 %v980
      %1023 = vmatprep.subr.bf16.mxu0 0
      %1024 = vmatpush1.bf16.msra.mxu0 %v979
      %1025 = vmatprep.subr.bf16.mxu0 0
      %1026 = vmatpush1.bf16.msra.mxu0 %v978
      %1027 = vmatprep.subr.bf16.mxu0 0
      %1028 = vmatpush1.bf16.msra.mxu0 %v977
      %1029 = vmatprep.subr.bf16.mxu0 0
      %1030 = vmatpush1.bf16.msra.mxu0 %v976
      %1031 = vmatprep.subr.bf16.mxu0 0
      %1032 = vmatpush1.bf16.msra.mxu0 %v975
      %1033 = vmatprep.subr.bf16.mxu0 0
      %1034 = vmatpush1.bf16.msra.mxu0 %v974
      %1035 = vmatprep.subr.bf16.mxu0 0
      %1036 = vmatpush1.bf16.msra.mxu0 %v973
      %1037 = vmatprep.subr.bf16.mxu0 0
      %1038 = vmatpush2.bf16.msra.mxu0 %v988
      %1039 = vmatprep.subr.bf16.mxu0 0
      %1040 = vmatpush2.bf16.msra.mxu0 %v987
      %1041 = vmatprep.subr.bf16.mxu0 0
      %1042 = vmatpush2.bf16.msra.mxu0 %v986
      %1043 = vmatprep.subr.bf16.mxu0 0
      %1044 = vmatpush2.bf16.msra.mxu0 %v985
      %1045 = vmatprep.subr.bf16.mxu0 0
      %1046 = vmatpush2.bf16.msra.mxu0 %v984
      %1047 = vmatprep.subr.bf16.mxu0 0
      %1048 = vmatpush2.bf16.msra.mxu0 %v983
      %1049 = vmatprep.subr.bf16.mxu0 0
      %1050 = vmatpush2.bf16.msra.mxu0 %v982
      %1051 = vmatprep.subr.bf16.mxu0 0
      %1052 = vmatpush2.bf16.msra.mxu0 %v981
      %1053 = vmatprep.mubr.bf16.mxu0 %v811
      %1054 = vmatmul.mubr.bf16.gmra.mxu0 %v810
      %v1055 = vpop.f32.mrf.mxu0
      %v1056 = vadd.f32 %v875, %v1055
      %v1057 = vpop.f32.mrf.mxu0
      %v1058 = vpop.f32.mrf.mxu0
      %v1059 = vadd.f32 %v875, %v1058
      %v1060 = vpop.f32.mrf.mxu0
      %1061 = vmatprep.mubr.bf16.mxu0 %v814
      %1062 = vmatmul.mubr.bf16.gmra.mxu0 %v813
      %v1063 = vpop.f32.mrf.mxu0
      %v1064 = vadd.f32 %v875, %v1063
      %v1065 = vpop.f32.mrf.mxu0
      %v1066 = vpop.f32.mrf.mxu0
      %v1067 = vadd.f32 %v875, %v1066
      %v1068 = vpop.f32.mrf.mxu0
      %1069 = vmatprep.mubr.bf16.mxu0 %v817
      %1070 = vmatmul.mubr.bf16.gmra.mxu0 %v816
      %v1071 = vpop.f32.mrf.mxu0
      %v1072 = vadd.f32 %v875, %v1071
      %v1073 = vpop.f32.mrf.mxu0
      %v1074 = vpop.f32.mrf.mxu0
      %v1075 = vadd.f32 %v875, %v1074
      %v1076 = vpop.f32.mrf.mxu0
      %1077 = vmatprep.mubr.bf16.mxu0 %v820
      %1078 = vmatmul.mubr.bf16.gmra.mxu0 %v819
      %v1079 = vpop.f32.mrf.mxu0
      %v1080 = vadd.f32 %v875, %v1079
      %v1081 = vpop.f32.mrf.mxu0
      %v1082 = vpop.f32.mrf.mxu0
      %v1083 = vadd.f32 %v875, %v1082
      %v1084 = vpop.f32.mrf.mxu0
      %1085 = vdwg.mxu0
      %1086 = vmatprep.subr.bf16.mxu0 0
      %1087 = vmatpush1.bf16.msra.mxu0 %v996
      %1088 = vmatprep.subr.bf16.mxu0 0
      %1089 = vmatpush1.bf16.msra.mxu0 %v995
      %1090 = vmatprep.subr.bf16.mxu0 0
      %1091 = vmatpush1.bf16.msra.mxu0 %v994
      %1092 = vmatprep.subr.bf16.mxu0 0
      %1093 = vmatpush1.bf16.msra.mxu0 %v993
      %1094 = vmatprep.subr.bf16.mxu0 0
      %1095 = vmatpush1.bf16.msra.mxu0 %v992
      %1096 = vmatprep.subr.bf16.mxu0 0
      %1097 = vmatpush1.bf16.msra.mxu0 %v991
      %1098 = vmatprep.subr.bf16.mxu0 0
      %1099 = vmatpush1.bf16.msra.mxu0 %v990
      %1100 = vmatprep.subr.bf16.mxu0 0
      %1101 = vmatpush1.bf16.msra.mxu0 %v989
      %1102 = vmatprep.subr.bf16.mxu0 0
      %1103 = vmatpush2.bf16.msra.mxu0 0
      %1104 = vmatprep.subr.bf16.mxu0 0
      %1105 = vmatpush2.bf16.msra.mxu0 0
      %1106 = vmatprep.subr.bf16.mxu0 0
      %1107 = vmatpush2.bf16.msra.mxu0 0
      %1108 = vmatprep.subr.bf16.mxu0 0
      %1109 = vmatpush2.bf16.msra.mxu0 0
      %1110 = vmatprep.subr.bf16.mxu0 0
      %1111 = vmatpush2.bf16.msra.mxu0 0
      %1112 = vmatprep.subr.bf16.mxu0 0
      %1113 = vmatpush2.bf16.msra.mxu0 0
      %1114 = vmatprep.subr.bf16.mxu0 0
      %1115 = vmatpush2.bf16.msra.mxu0 0
      %1116 = vmatprep.subr.bf16.mxu0 0
      %1117 = vmatpush2.bf16.msra.mxu0 0
      %1118 = vmatprep.mubr.bf16.mxu0 0
      %1119 = vmatmul.mubr.bf16.gmra.mxu0 %v812
      %v1120 = vpop.f32.mrf.mxu0
      %v1121 = vadd.f32 %v1056, %v1120
      %v1122 = vpop.f32.mrf.mxu0
      %v1123 = vpop.f32.mrf.mxu0
      %v1124 = vadd.f32 %v1059, %v1123
      %v1125 = vpop.f32.mrf.mxu0
      %1126 = vmatprep.mubr.bf16.mxu0 0
      %1127 = vmatmul.mubr.bf16.gmra.mxu0 %v815
      %v1128 = vpop.f32.mrf.mxu0
      %v1129 = vadd.f32 %v1064, %v1128
      %v1130 = vpop.f32.mrf.mxu0
      %v1131 = vpop.f32.mrf.mxu0
      %v1132 = vadd.f32 %v1067, %v1131
      %v1133 = vpop.f32.mrf.mxu0
      %1134 = vmatprep.mubr.bf16.mxu0 0
      %1135 = vmatmul.mubr.bf16.gmra.mxu0 %v818
      %v1136 = vpop.f32.mrf.mxu0
      %v1137 = vadd.f32 %v1072, %v1136
      %v1138 = vpop.f32.mrf.mxu0
      %v1139 = vpop.f32.mrf.mxu0
      %v1140 = vadd.f32 %v1075, %v1139
      %v1141 = vpop.f32.mrf.mxu0
      %1142 = vmatprep.mubr.bf16.mxu0 0
      %1143 = vmatmul.mubr.bf16.gmra.mxu0 %v821
      %v1144 = vpop.f32.mrf.mxu0
      %v1145 = vadd.f32 %v1080, %v1144
      %v1146 = vpop.f32.mrf.mxu0
      %v1147 = vpop.f32.mrf.mxu0
      %v1148 = vadd.f32 %v1083, %v1147
      %v1149 = vpop.f32.mrf.mxu0
      %1150 = vdwg.mxu0
      %v1151 = vadd.f32 %v1121, %v234
      %v1152 = vadd.f32 %v1124, %v235
      %v1153 = vadd.f32 %v1129, %v236
      %v1154 = vadd.f32 %v1132, %v237
      %v1155 = vadd.f32 %v1137, %v238
      %v1156 = vadd.f32 %v1140, %v239
      %v1157 = vadd.f32 %v1145, %v240
      %v1158 = vadd.f32 %v1148, %v241
      %v1159 = vmax.f32 %v1151, 0.0
      %v1160 = vmax.f32 %v1152, 0.0
      %v1161 = vmax.f32 %v1153, 0.0
      %v1162 = vmax.f32 %v1154, 0.0
      %v1163 = vmax.f32 %v1155, 0.0
      %v1164 = vmax.f32 %v1156, 0.0
      %v1165 = vmax.f32 %v1157, 0.0
      %v1166 = vmax.f32 %v1158, 0.0
      %1167 = vst [vmem:[%s231] sm:$0xff] %v1159
      %1168 = vst [vmem:[%s231 + $0x8] sm:$0xff] %v1160
      %1169 = vst [vmem:[%s231 + $0x10] sm:$0xff] %v1161
      %1170 = vst [vmem:[%s231 + $0x18] sm:$0xff] %v1162
      %1171 = vst [vmem:[%s231 + $0x20] sm:$0xff] %v1163
      %1172 = vst [vmem:[%s231 + $0x28] sm:$0xff] %v1164
      %1173 = vst [vmem:[%s231 + $0x30] sm:$0xff] %v1165
      %1174 = vst [vmem:[%s231 + $0x38] sm:$0xff] %v1166
      %s1175 = smul.u32 4, %s16
      %p1176 = scmp.lt.s32.totalorder %s1175, 7
      %s1177 = scalar_select %p1176, %s1175, 7
      %s1178 = smul.addr %s1177, 2
      %s1179 = smul.addr %s1178, 8
      %s1180 = scalar_lea.vmem %s5, %s1179
      // Predicated region
      $region41: #{basic_block_forward.1} parent=39 // pred_check
        %p1181 = pneg %p144
      $region42: #{basic_block_forward.1} parent=39 // pred_check_branch
        %1183 = sbr.rel (%p1181) target = $region44
      $region43: #{basic_block_forward.1} parent=39 // pred_region
        %s1184 = smul.u32 4, %s16
      $region44: #{basic_block_forward.1} parent=39 // pred_fallthru
        _
    $region40: #{basic_block_forward.1} parent=5 // pred_fallthru
      _
    %p1185 = scmp.le.s32.totalorder 2, %s11
    // Predicated region
    $region45: #{basic_block_forward.1} parent=5 // pred_check
      %p1186 = pneg %p1185
    $region46: #{basic_block_forward.1} parent=5 // pred_check_branch
      %1188 = sbr.rel (%p1186) target = $region48
    $region47: #{basic_block_forward.1} parent=5 // pred_region
      %s1189 = ssub.s32 %s11, 2
      // Predicated region
      $region49: #{basic_block_forward.1} parent=47 // pred_check
        %p1190 = pneg %p150
      $region50: #{basic_block_forward.1} parent=47 // pred_check_branch
        %1192 = sbr.rel (%p1190) target = $region52
      $region51: #{basic_block_forward.1} parent=47 // pred_region
        %s1193 = smul.u32 4, %s17
        %p1194 = scmp.lt.s32.totalorder %s1193, 7
        %s1195 = scalar_select %p1194, %s1193, 7
        %s1196 = smul.addr %s1195, 2
        %s1197 = smul.addr %s1196, 8
        %s1198 = scalar_lea.vmem %s5, %s1197
      $region52: #{basic_block_forward.1} parent=47 // pred_fallthru
        _
    $region48: #{basic_block_forward.1} parent=5 // pred_fallthru
      _
  $region6: #{basic_block_forward.1} parent=0 // loop_footer
    %s15 = sadd.s32 1, %s11
  $region7: #{basic_block_forward.1} parent=0 // loop_footer_branch
    %10 = sbr.rel target = $region3
  $region8: #{basic_block_forward.1} parent=0 // loop_exit
    _

</llo_original>
